<compile_context>
chip_gen: v7x
topology: tpu7x:2x2x1
jax: 0.10.0
libtpu: 0.0.40
codegen_flags: <defaults>
</compile_context>

<pallas_src>
import jax
import jax.numpy as jnp
import numpy as np
from jax import lax
from jax.experimental import pallas as pl
from jax.experimental.pallas import tpu as pltpu


# ----------------------------------------------------------------------------
# Kernel A: fused projection prologue over the flattened (B*T, D) token axis.
#   proj       = relu(H @ [W_dep | W_head] + [b_dep | b_head])
#   [tmp|bias] = dep @ [U | u_bias]      (single MXU matmul; bias = last column)
# ----------------------------------------------------------------------------
def fused_proj_kernel(h_ref, wcat_ref, bcat_ref, uext_ref,
                      tmp_ref, head_ref, bias_ref):
    da = head_ref.shape[-1]

    proj = jnp.dot(h_ref[...], wcat_ref[...],
                   preferred_element_type=jnp.float32)          # (tm, 2*Da)
    proj = jnp.maximum(proj + bcat_ref[...], 0.0)

    dep = proj[:, :da]                                          # (tm, Da)
    head_ref[...] = proj[:, da:]                                # (tm, Da)

    tb = jnp.dot(dep, uext_ref[...],
                 preferred_element_type=jnp.float32)            # (tm, Da+1)
    tmp_ref[...] = tb[:, :da]                                   # dep @ U
    bias_ref[...] = tb[:, da:]                                  # dep @ u_bias


# ----------------------------------------------------------------------------
# Kernel B: tiled biaffine score
#   S[b, i, j] = tmp[b, i] . head[b, j] + bias[b, i]
# Contraction on the last dims (no explicit transpose of head).
# ----------------------------------------------------------------------------
def biaffine_score_kernel(tmp_ref, head_ref, bias_ref, out_ref):
    s = lax.dot_general(
        tmp_ref[0], head_ref[0],
        dimension_numbers=(((1,), (1,)), ((), ())),
        preferred_element_type=jnp.float32)                     # (Ti, Tj)
    out_ref[0] = s + bias_ref[0]                                # bias (Ti,1) bcast


def _pick_tile(n, prefs):
    """Largest preferred lane/sublane-friendly tile that divides n, else n."""
    for p in prefs:
        if n >= p and n % p == 0:
            return p
    return n


def biaffine_arc_scores(h, w_dep, b_dep, w_head, b_head, u, u_bias):
    B, T, D = h.shape
    Da = u.shape[0]
    BT = B * T

    # Host-side fusion of the two projection weights, and of [U | u_bias].
    h_flat = h.reshape(BT, D)
    w_cat = jnp.concatenate([w_dep, w_head], axis=1)            # (D, 2*Da)
    b_cat = jnp.concatenate([b_dep, b_head], axis=1)            # (1, 2*Da)
    u_ext = jnp.concatenate([u, u_bias], axis=1)                # (Da, Da+1)

    # --- Stage 1: fused projection over flattened tokens ---------------------
    tile_m = _pick_tile(BT, (512, 256, 128))
    n_m = BT // tile_m

    tmp, head, bias = pl.pallas_call(
        fused_proj_kernel,
        out_shape=(
            jax.ShapeDtypeStruct((BT, Da), jnp.float32),
            jax.ShapeDtypeStruct((BT, Da), jnp.float32),
            jax.ShapeDtypeStruct((BT, 1), jnp.float32),
        ),
        grid_spec=pltpu.PrefetchScalarGridSpec(
            num_scalar_prefetch=0,
            grid=(n_m,),
            in_specs=[
                pl.BlockSpec((tile_m, D), lambda m: (m, 0)),     # H rows
                pl.BlockSpec((D, 2 * Da), lambda m: (0, 0)),     # [W_dep|W_head]
                pl.BlockSpec((1, 2 * Da), lambda m: (0, 0)),     # [b_dep|b_head]
                pl.BlockSpec((Da, Da + 1), lambda m: (0, 0)),    # [U | u_bias]
            ],
            out_specs=[
                pl.BlockSpec((tile_m, Da), lambda m: (m, 0)),    # tmp = dep @ U
                pl.BlockSpec((tile_m, Da), lambda m: (m, 0)),    # head
                pl.BlockSpec((tile_m, 1), lambda m: (m, 0)),     # dep-side bias
            ],
        ),
        compiler_params=pltpu.CompilerParams(
            dimension_semantics=("parallel",)),
    )(h_flat, w_cat, b_cat, u_ext)

    tmp = tmp.reshape(B, T, Da)
    head = head.reshape(B, T, Da)
    bias = bias.reshape(B, T, 1)

    # --- Stage 2: tiled (T, T) biaffine scores --------------------------------
    ti = _pick_tile(T, (256, 128))          # query-tile (sublane axis)
    tj = _pick_tile(T, (512, 256, 128))     # key-tile, lane-dense when possible

    scores = pl.pallas_call(
        biaffine_score_kernel,
        out_shape=jax.ShapeDtypeStruct((B, T, T), jnp.float32),
        grid_spec=pltpu.PrefetchScalarGridSpec(
            num_scalar_prefetch=0,
            grid=(B, T // ti, T // tj),
            in_specs=[
                pl.BlockSpec((1, ti, Da), lambda b, i, j: (b, i, 0)),  # tmp
                pl.BlockSpec((1, tj, Da), lambda b, i, j: (b, j, 0)),  # head
                pl.BlockSpec((1, ti, 1), lambda b, i, j: (b, i, 0)),   # bias
            ],
            out_specs=pl.BlockSpec((1, ti, tj), lambda b, i, j: (b, i, j)),
        ),
        compiler_params=pltpu.CompilerParams(
            dimension_semantics=("parallel", "parallel", "parallel")),
    )(tmp, head, bias)
    return scores


def reference(h, w_dep, b_dep, w_head, b_head, u, u_bias):
    dep = jnp.maximum(jnp.einsum('btd,de->bte', h, w_dep) + b_dep, 0.0)
    head = jnp.maximum(jnp.einsum('btd,de->bte', h, w_head) + b_head, 0.0)
    scores = jnp.einsum('bie,ef,bjf->bij', dep, u, head)
    bias = jnp.einsum('bie,ef->bif', dep, u_bias)                # (B, T, 1)
    return scores + bias


if __name__ == "__main__":
    # Small, deterministic shapes: batch=2, seq=8, hidden=32, arc-MLP dim=32.
    B, T, D, Da = 2, 8, 32, 32
    key = jax.random.PRNGKey(0)
    ks = jax.random.split(key, 7)

    h      = jax.random.normal(ks[0], (B, T, D), dtype=jnp.float32)
    w_dep  = jax.random.normal(ks[1], (D, Da), dtype=jnp.float32) * 0.1
    b_dep  = jax.random.normal(ks[2], (1, Da), dtype=jnp.float32) * 0.1
    w_head = jax.random.normal(ks[3], (D, Da), dtype=jnp.float32) * 0.1
    b_head = jax.random.normal(ks[4], (1, Da), dtype=jnp.float32) * 0.1
    u      = jax.random.normal(ks[5], (Da, Da), dtype=jnp.float32) * 0.1
    u_bias = jax.random.normal(ks[6], (Da, 1), dtype=jnp.float32) * 0.1

    out = biaffine_arc_scores(h, w_dep, b_dep, w_head, b_head, u, u_bias)
    out = jax.block_until_ready(out)

    ref = reference(h, w_dep, b_dep, w_head, b_head, u, u_bias)
    assert out.shape == (B, T, T)
    np.testing.assert_allclose(np.asarray(out), np.asarray(ref),
                               rtol=1e-4, atol=1e-4)
    print("KERNEL_OK")
</pallas_src>

<mosaic_0001>
module attributes {stable_mosaic.version = 11 : i64} {
  func.func @fused_proj_kernel(%arg0: i32, %arg1: memref<16x32xf32, #tpu.memory_space<vmem>>, %arg2: memref<32x64xf32, #tpu.memory_space<vmem>>, %arg3: memref<1x64xf32, #tpu.memory_space<vmem>>, %arg4: memref<32x33xf32, #tpu.memory_space<vmem>>, %arg5: memref<16x32xf32, #tpu.memory_space<vmem>>, %arg6: memref<16x32xf32, #tpu.memory_space<vmem>>, %arg7: memref<16x1xf32, #tpu.memory_space<vmem>>) attributes {dimension_semantics = [#tpu.dimension_semantics<parallel>], iteration_bounds = array<i64: 1>, scalar_prefetch = 0 : i64, scratch_operands = 0 : i64, tpu.core_type = #tpu.core_type<tc>, window_params = [{transform_indices = @transform_0, window_bounds = array<i64: 16, 32>}, {pipeline_mode = #tpu.pipeline_mode<synchronous>, transform_indices = @transform_1, window_bounds = array<i64: 32, 64>}, {pipeline_mode = #tpu.pipeline_mode<synchronous>, transform_indices = @transform_2, window_bounds = array<i64: 1, 64>}, {pipeline_mode = #tpu.pipeline_mode<synchronous>, transform_indices = @transform_3, window_bounds = array<i64: 32, 33>}, {transform_indices = @transform_4, window_bounds = array<i64: 16, 32>}, {transform_indices = @transform_5, window_bounds = array<i64: 16, 32>}, {transform_indices = @transform_6, window_bounds = array<i64: 16, 1>}]} {
    %c0 = arith.constant 0 : index
    %c0_0 = arith.constant 0 : index
    %0 = vector.load %arg1[%c0, %c0_0] : memref<16x32xf32, #tpu.memory_space<vmem>>, vector<16x32xf32>
    %c0_1 = arith.constant 0 : index
    %c0_2 = arith.constant 0 : index
    %1 = vector.load %arg2[%c0_1, %c0_2] : memref<32x64xf32, #tpu.memory_space<vmem>>, vector<32x64xf32>
    %cst = arith.constant dense<0.000000e+00> : vector<16x64xf32>
    %2 = tpu.matmul %0, %1, %cst {dimension_numbers = #tpu.dot_dimension_numbers<[1], [0], [0], [1], [0, 0, 1, 1], [], []>} : vector<16x32xf32>, vector<32x64xf32>, vector<16x64xf32> -> vector<16x64xf32>
    %c0_3 = arith.constant 0 : index
    %c0_4 = arith.constant 0 : index
    %3 = vector.load %arg3[%c0_3, %c0_4] : memref<1x64xf32, #tpu.memory_space<vmem>>, vector<1x64xf32>
    %4 = vector.broadcast %3 : vector<1x64xf32> to vector<16x64xf32>
    %5 = arith.addf %2, %4 : vector<16x64xf32>
    %cst_5 = arith.constant 0.000000e+00 : f32
    %6 = vector.broadcast %cst_5 : f32 to vector<16x64xf32>
    %7 = arith.maximumf %5, %6 : vector<16x64xf32>
    %8 = vector.extract_strided_slice %7 {offsets = [0, 0], sizes = [16, 32], strides = [1, 1]} : vector<16x64xf32> to vector<16x32xf32>
    %9 = vector.extract_strided_slice %7 {offsets = [0, 32], sizes = [16, 32], strides = [1, 1]} : vector<16x64xf32> to vector<16x32xf32>
    %c0_6 = arith.constant 0 : index
    %c0_7 = arith.constant 0 : index
    %10 = vector.load %arg6[%c0_6, %c0_7] : memref<16x32xf32, #tpu.memory_space<vmem>>, vector<16x32xf32>
    tpu.vector_store %arg6[%c0_6, %c0_7], %9 {strides = array<i32>} : memref<16x32xf32, #tpu.memory_space<vmem>>, vector<16x32xf32>,
    %c0_8 = arith.constant 0 : index
    %c0_9 = arith.constant 0 : index
    %11 = vector.load %arg4[%c0_8, %c0_9] : memref<32x33xf32, #tpu.memory_space<vmem>>, vector<32x33xf32>
    %cst_10 = arith.constant dense<0.000000e+00> : vector<16x33xf32>
    %12 = tpu.matmul %8, %11, %cst_10 {dimension_numbers = #tpu.dot_dimension_numbers<[1], [0], [0], [1], [0, 0, 1, 1], [], []>} : vector<16x32xf32>, vector<32x33xf32>, vector<16x33xf32> -> vector<16x33xf32>
    %13 = vector.extract_strided_slice %12 {offsets = [0, 0], sizes = [16, 32], strides = [1, 1]} : vector<16x33xf32> to vector<16x32xf32>
    %c0_11 = arith.constant 0 : index
    %c0_12 = arith.constant 0 : index
    %14 = vector.load %arg5[%c0_11, %c0_12] : memref<16x32xf32, #tpu.memory_space<vmem>>, vector<16x32xf32>
    tpu.vector_store %arg5[%c0_11, %c0_12], %13 {strides = array<i32>} : memref<16x32xf32, #tpu.memory_space<vmem>>, vector<16x32xf32>,
    %15 = vector.extract_strided_slice %12 {offsets = [0, 32], sizes = [16, 1], strides = [1, 1]} : vector<16x33xf32> to vector<16x1xf32>
    %c0_13 = arith.constant 0 : index
    %c0_14 = arith.constant 0 : index
    %16 = vector.load %arg7[%c0_13, %c0_14] : memref<16x1xf32, #tpu.memory_space<vmem>>, vector<16x1xf32>
    tpu.vector_store %arg7[%c0_13, %c0_14], %15 {strides = array<i32>} : memref<16x1xf32, #tpu.memory_space<vmem>>, vector<16x1xf32>,
    return
  }
  func.func @transform_0(%arg0: i32) -> (i32, i32) {
    %c0_i32 = arith.constant 0 : i32
    %c0_i32_0 = arith.constant 0 : i32
    return %arg0, %c0_i32 : i32, i32
  }
  func.func @transform_1(%arg0: i32) -> (i32, i32) {
    %c0_i32 = arith.constant 0 : i32
    %c0_i32_0 = arith.constant 0 : i32
    %c0_i32_1 = arith.constant 0 : i32
    return %c0_i32, %c0_i32_0 : i32, i32
  }
  func.func @transform_2(%arg0: i32) -> (i32, i32) {
    %c0_i32 = arith.constant 0 : i32
    %c0_i32_0 = arith.constant 0 : i32
    %c0_i32_1 = arith.constant 0 : i32
    return %c0_i32, %c0_i32_0 : i32, i32
  }
  func.func @transform_3(%arg0: i32) -> (i32, i32) {
    %c0_i32 = arith.constant 0 : i32
    %c0_i32_0 = arith.constant 0 : i32
    %c0_i32_1 = arith.constant 0 : i32
    return %c0_i32, %c0_i32_0 : i32, i32
  }
  func.func @transform_4(%arg0: i32) -> (i32, i32) {
    %c0_i32 = arith.constant 0 : i32
    %c0_i32_0 = arith.constant 0 : i32
    return %arg0, %c0_i32 : i32, i32
  }
  func.func @transform_5(%arg0: i32) -> (i32, i32) {
    %c0_i32 = arith.constant 0 : i32
    %c0_i32_0 = arith.constant 0 : i32
    return %arg0, %c0_i32 : i32, i32
  }
  func.func @transform_6(%arg0: i32) -> (i32, i32) {
    %c0_i32 = arith.constant 0 : i32
    %c0_i32_0 = arith.constant 0 : i32
    return %arg0, %c0_i32 : i32, i32
  }
}

</mosaic_0001>

<llo_original>
// kernel: tpu_custom_call.1
$region0: #{tpu_custom_call.1}
  #allocation0 [shape = 'u32[]', space=smem, size = 0x4, offset = 0x4, fixed_abs, tag = 'smem constant byte address 0x4 - core index']
  #allocation1 [shape = 'u32[144,128]{1,0:T(1,128)}', space=vmem, size = 0x12000, scoped, tag = 'internal scratch']
  %s0 = inlined_call_operand.hbm [shape: f32[16,32], index: 0, kind: input, shape index: {}]
  %s1 = inlined_call_operand.hbm [shape: f32[32,64], index: 1, kind: input, shape index: {}]
  %s2 = inlined_call_operand.vmem [shape: f32[1,64], index: 2, kind: input, shape index: {}]
  %s3 = inlined_call_operand.hbm [shape: f32[32,33], index: 3, kind: input, shape index: {}]
  %s4 = inlined_call_operand.hbm [shape: f32[16,32], index: 4, kind: output, shape index: {0}]
  %s5 = inlined_call_operand.hbm [shape: f32[16,32], index: 5, kind: output, shape index: {1}]
  %s6 = inlined_call_operand.vmem [shape: f32[16,1], index: 6, kind: output, shape index: {2}]
  %7 = xla_tuple %s4, %s5, %s6
  %s8 = sld [smem:[#allocation0]]
  $region54: #{tpu_custom_call.1} parent=0
    _
  %s10 = ssub.s32 1, %s8
  %s11 = scalar_select 0, %s10, %s8
  $region1: #{tpu_custom_call.1} parent=0
    #allocation2 [shape = 'u8[8192]{0}', space=vmem, size = 0x2000, scoped, tag = 'input window, operand 0, single buffered']
    #allocation3 [shape = 's32[1]{0}', space=sflag, size = 0x4, scoped, tag = 'scoped memory for tpu_custom_call.1']
    #allocation4 [shape = 's32[1]{0}', space=sflag, size = 0x4, scoped, tag = 'scoped memory for tpu_custom_call.1']
    #allocation5 [shape = 'u8[16384]{0}', space=vmem, size = 0x4000, scoped, tag = 'input window, operand 1, single buffered']
    #allocation6 [shape = 's32[1]{0}', space=sflag, size = 0x4, scoped, tag = 'scoped memory for tpu_custom_call.1']
    #allocation7 [shape = 'u8[16384]{0}', space=vmem, size = 0x4000, scoped, tag = 'input window, operand 3, single buffered']
    #allocation8 [shape = 'u8[8192]{0}', space=vmem, size = 0x2000, scoped, tag = 'output window, operand 0, single buffered']
    #allocation9 [shape = 'u8[8192]{0}', space=vmem, size = 0x2000, scoped, tag = 'output window, operand 1, single buffered']
    #allocation10 [shape = 's32[1]{0}', space=sflag, size = 0x4, scoped, tag = 'scoped memory for tpu_custom_call.1']
    %12 = vsyncpa [#allocation3], 0
    %13 = vsyncpa [#allocation6], 0
    %14 = vsyncpa [#allocation4], 0
    %15 = vsyncpa [#allocation10], 0
    // Predicated region
    $region2: #{tpu_custom_call.1} parent=1 // pred_check
      _
    $region3: #{tpu_custom_call.1} parent=1 // pred_check_branch
      %17 = sbr.rel (0) target = $region5
    $region4: #{tpu_custom_call.1} parent=1 // pred_region
      %s19 = ssub.s32 256, 256
      %20 = vsyncadd [#allocation3], %s19
      %s21 = sshll.u32 [#allocation2], 4
      %s22 = int_to_ptr.vmem [resolvable:$true] %s21
      %27 = dma.hbm_to_vmem [thread:$0]  %s0, 256, %s22, [#allocation3], 128, 128, 8
    $region5: #{tpu_custom_call.1} parent=1 // pred_fallthru
      _
    // Predicated region
    $region6: #{tpu_custom_call.1} parent=1 // pred_check
      _
    $region7: #{tpu_custom_call.1} parent=1 // pred_check_branch
      %29 = sbr.rel (0) target = $region9
    $region8: #{tpu_custom_call.1} parent=1 // pred_region
      %s31 = ssub.s32 512, 512
      %32 = vsyncadd [#allocation6], %s31
      %s33 = sshll.u32 [#allocation5], 4
      %s34 = int_to_ptr.vmem [resolvable:$true] %s33
      %39 = dma.hbm_to_vmem [thread:$0]  %s1, 512, %s34, [#allocation6], 128, 128, 8
    $region9: #{tpu_custom_call.1} parent=1 // pred_fallthru
      _
    // Predicated region
    $region10: #{tpu_custom_call.1} parent=1 // pred_check
      _
    $region11: #{tpu_custom_call.1} parent=1 // pred_check_branch
      %41 = sbr.rel (0) target = $region13
    $region12: #{tpu_custom_call.1} parent=1 // pred_region
      _
    $region13: #{tpu_custom_call.1} parent=1 // pred_fallthru
      _
    // Predicated region
    $region14: #{tpu_custom_call.1} parent=1 // pred_check
      _
    $region15: #{tpu_custom_call.1} parent=1 // pred_check_branch
      %43 = sbr.rel (0) target = $region17
    $region16: #{tpu_custom_call.1} parent=1 // pred_region
      %s45 = ssub.s32 512, 512
      %46 = vsyncadd [#allocation6], %s45
      %s47 = sshll.u32 [#allocation7], 4
      %s48 = int_to_ptr.vmem [resolvable:$true] %s47
      %53 = dma.hbm_to_vmem [thread:$0]  %s3, 512, %s48, [#allocation6], 128, 128, 8
    $region17: #{tpu_custom_call.1} parent=1 // pred_fallthru
      _
    // Predicated region
    $region18: #{tpu_custom_call.1} parent=1 // pred_check
      _
    $region19: #{tpu_custom_call.1} parent=1 // pred_check_branch
      %55 = sbr.rel (0) target = $region21
    $region20: #{tpu_custom_call.1} parent=1 // pred_region
      %56 = dma.done [#allocation3], 256
    $region21: #{tpu_custom_call.1} parent=1 // pred_fallthru
      _
    // Predicated region
    $region22: #{tpu_custom_call.1} parent=1 // pred_check
      _
    $region23: #{tpu_custom_call.1} parent=1 // pred_check_branch
      %58 = sbr.rel (0) target = $region25
    $region24: #{tpu_custom_call.1} parent=1 // pred_region
      %59 = dma.done [#allocation6], 512
    $region25: #{tpu_custom_call.1} parent=1 // pred_fallthru
      _
    // Predicated region
    $region26: #{tpu_custom_call.1} parent=1 // pred_check
      _
    $region27: #{tpu_custom_call.1} parent=1 // pred_check_branch
      %61 = sbr.rel (0) target = $region29
    $region28: #{tpu_custom_call.1} parent=1 // pred_region
      %62 = dma.done [#allocation6], 512
    $region29: #{tpu_custom_call.1} parent=1 // pred_fallthru
      _
    %v63 = vld [vmem:[#allocation2] sm:$0xff]
    %v64 = vld [vmem:[#allocation2 + $0x8] sm:$0xff]
    %v65 = vld [vmem:[#allocation5] sm:$0xff]
    %v66 = vld [vmem:[#allocation5 + $0x8] sm:$0xff]
    %v67 = vld [vmem:[#allocation5 + $0x10] sm:$0xff]
    %v68 = vld [vmem:[#allocation5 + $0x18] sm:$0xff]
    %v69 = vld [vmem:[%s2] sm:$0x1]
    %v71 = vlaneseq
    %v72 = vshrl.u32 %v71, 7
    %v73 = vsub.s32 0, %v72
    %v74 = vrot.slane %v69, %v73
    %vm76 = vcmask 261120
    %v78 = vsel %vm76, %v63, 0
    %v81 = vsel %vm76, %v64, 0
    %83 = vmatprep.subr.mxu0 0.0
    %84 = vmatpush1.msra.mxu0 %v65
    %85 = vmatprep.subr.mxu0 0.0
    %86 = vmatpush1.msra.mxu0 %v66
    %87 = vmatprep.subr.mxu0 0.0
    %88 = vmatpush1.msra.mxu0 %v67
    %89 = vmatprep.subr.mxu0 0.0
    %90 = vmatpush1.msra.mxu0 %v68
    %91 = vmatprep.subr.mxu0 0.0
    %92 = vmatpush1.msra.mxu0 0.0
    %93 = vmatprep.subr.mxu0 0.0
    %94 = vmatpush1.msra.mxu0 0.0
    %95 = vmatprep.subr.mxu0 0.0
    %96 = vmatpush1.msra.mxu0 0.0
    %97 = vmatprep.subr.mxu0 0.0
    %98 = vmatpush1.msra.mxu0 0.0
    %99 = vmatprep.subr.mxu0 0.0
    %100 = vmatpush1.msra.mxu0 0.0
    %101 = vmatprep.subr.mxu0 0.0
    %102 = vmatpush1.msra.mxu0 0.0
    %103 = vmatprep.subr.mxu0 0.0
    %104 = vmatpush1.msra.mxu0 0.0
    %105 = vmatprep.subr.mxu0 0.0
    %106 = vmatpush1.msra.mxu0 0.0
    %107 = vmatprep.subr.mxu0 0.0
    %108 = vmatpush1.msra.mxu0 0.0
    %109 = vmatprep.subr.mxu0 0.0
    %110 = vmatpush1.msra.mxu0 0.0
    %111 = vmatprep.subr.mxu0 0.0
    %112 = vmatpush1.msra.mxu0 0.0
    %113 = vmatprep.subr.mxu0 0.0
    %114 = vmatpush1.msra.mxu0 0.0
    %115 = vmatprep.subr.mxu0 0.0
    %116 = vmatpush1.msra.mxu0 0.0
    %117 = vmatprep.subr.mxu0 0.0
    %118 = vmatpush1.msra.mxu0 0.0
    %119 = vmatprep.subr.mxu0 0.0
    %120 = vmatpush1.msra.mxu0 0.0
    %121 = vmatprep.subr.mxu0 0.0
    %122 = vmatpush1.msra.mxu0 0.0
    %123 = vmatprep.subr.mxu0 0.0
    %124 = vmatpush1.msra.mxu0 0.0
    %125 = vmatprep.subr.mxu0 0.0
    %126 = vmatpush1.msra.mxu0 0.0
    %127 = vmatprep.subr.mxu0 0.0
    %128 = vmatpush1.msra.mxu0 0.0
    %129 = vmatprep.subr.mxu0 0.0
    %130 = vmatpush1.msra.mxu0 0.0
    %131 = vmatprep.subr.mxu0 0.0
    %132 = vmatpush1.msra.mxu0 0.0
    %133 = vmatprep.subr.mxu0 0.0
    %134 = vmatpush1.msra.mxu0 0.0
    %135 = vmatprep.subr.mxu0 0.0
    %136 = vmatpush1.msra.mxu0 0.0
    %137 = vmatprep.subr.mxu0 0.0
    %138 = vmatpush1.msra.mxu0 0.0
    %139 = vmatprep.subr.mxu0 0.0
    %140 = vmatpush1.msra.mxu0 0.0
    %141 = vmatprep.subr.mxu0 0.0
    %142 = vmatpush1.msra.mxu0 0.0
    %143 = vmatprep.subr.mxu0 0.0
    %144 = vmatpush1.msra.mxu0 0.0
    %145 = vmatprep.subr.mxu0 0.0
    %146 = vmatpush1.msra.mxu0 0.0
    %147 = vmatprep.mubr.f32.mxu0 0.0
    %148 = vmatmul.mubr.f32.gmra.mrb[0].mxu0 %v78
    %v149 = vpop.f32.mrb[0].mxu0
    %v150 = vadd.f32 %v74, %v149
    %v151 = vpop.f32.mrb[0].mxu0
    %152 = vmatprep.mubr.f32.mxu0 0.0
    %153 = vmatmul.mubr.f32.gmra.mrb[0].mxu0 %v81
    %v154 = vpop.f32.mrb[0].mxu0
    %v155 = vadd.f32 %v74, %v154
    %v156 = vpop.f32.mrb[0].mxu0
    %157 = vdwg.mxu0
    %v158 = vmax.f32 %v150, 0.0
    %v159 = vmax.f32 %v155, 0.0
    %162 = vrot.lane.b32.xlu0 %v158, 96
    %v163 = vpop.permute.xlu0 %162
    %164 = vrot.lane.b32.xlu0 %v159, 96
    %v165 = vpop.permute.xlu0 %164
    %168 = vst.msk [vmem:[#allocation9] sm:$0xff] %vm76, %v163
    %169 = vst.msk [vmem:[#allocation9 + $0x8] sm:$0xff] %vm76, %v165
    %v170 = vld [vmem:[#allocation7] sm:$0xff]
    %v171 = vld [vmem:[#allocation7 + $0x8] sm:$0xff]
    %v172 = vld [vmem:[#allocation7 + $0x10] sm:$0xff]
    %v173 = vld [vmem:[#allocation7 + $0x18] sm:$0xff]
    %v174 = vsel %vm76, %v158, 0
    %v176 = vsel %vm76, %v159, 0
    %178 = vmatprep.subr.mxu0 0.0
    %179 = vmatpush1.msra.mxu0 %v170
    %180 = vmatprep.subr.mxu0 0.0
    %181 = vmatpush1.msra.mxu0 %v171
    %182 = vmatprep.subr.mxu0 0.0
    %183 = vmatpush1.msra.mxu0 %v172
    %184 = vmatprep.subr.mxu0 0.0
    %185 = vmatpush1.msra.mxu0 %v173
    %186 = vmatprep.subr.mxu0 0.0
    %187 = vmatpush1.msra.mxu0 0.0
    %188 = vmatprep.subr.mxu0 0.0
    %189 = vmatpush1.msra.mxu0 0.0
    %190 = vmatprep.subr.mxu0 0.0
    %191 = vmatpush1.msra.mxu0 0.0
    %192 = vmatprep.subr.mxu0 0.0
    %193 = vmatpush1.msra.mxu0 0.0
    %194 = vmatprep.subr.mxu0 0.0
    %195 = vmatpush1.msra.mxu0 0.0
    %196 = vmatprep.subr.mxu0 0.0
    %197 = vmatpush1.msra.mxu0 0.0
    %198 = vmatprep.subr.mxu0 0.0
    %199 = vmatpush1.msra.mxu0 0.0
    %200 = vmatprep.subr.mxu0 0.0
    %201 = vmatpush1.msra.mxu0 0.0
    %202 = vmatprep.subr.mxu0 0.0
    %203 = vmatpush1.msra.mxu0 0.0
    %204 = vmatprep.subr.mxu0 0.0
    %205 = vmatpush1.msra.mxu0 0.0
    %206 = vmatprep.subr.mxu0 0.0
    %207 = vmatpush1.msra.mxu0 0.0
    %208 = vmatprep.subr.mxu0 0.0
    %209 = vmatpush1.msra.mxu0 0.0
    %210 = vmatprep.subr.mxu0 0.0
    %211 = vmatpush1.msra.mxu0 0.0
    %212 = vmatprep.subr.mxu0 0.0
    %213 = vmatpush1.msra.mxu0 0.0
    %214 = vmatprep.subr.mxu0 0.0
    %215 = vmatpush1.msra.mxu0 0.0
    %216 = vmatprep.subr.mxu0 0.0
    %217 = vmatpush1.msra.mxu0 0.0
    %218 = vmatprep.subr.mxu0 0.0
    %219 = vmatpush1.msra.mxu0 0.0
    %220 = vmatprep.subr.mxu0 0.0
    %221 = vmatpush1.msra.mxu0 0.0
    %222 = vmatprep.subr.mxu0 0.0
    %223 = vmatpush1.msra.mxu0 0.0
    %224 = vmatprep.subr.mxu0 0.0
    %225 = vmatpush1.msra.mxu0 0.0
    %226 = vmatprep.subr.mxu0 0.0
    %227 = vmatpush1.msra.mxu0 0.0
    %228 = vmatprep.subr.mxu0 0.0
    %229 = vmatpush1.msra.mxu0 0.0
    %230 = vmatprep.subr.mxu0 0.0
    %231 = vmatpush1.msra.mxu0 0.0
    %232 = vmatprep.subr.mxu0 0.0
    %233 = vmatpush1.msra.mxu0 0.0
    %234 = vmatprep.subr.mxu0 0.0
    %235 = vmatpush1.msra.mxu0 0.0
    %236 = vmatprep.subr.mxu0 0.0
    %237 = vmatpush1.msra.mxu0 0.0
    %238 = vmatprep.subr.mxu0 0.0
    %239 = vmatpush1.msra.mxu0 0.0
    %240 = vmatprep.subr.mxu0 0.0
    %241 = vmatpush1.msra.mxu0 0.0
    %242 = vmatprep.mubr.f32.mxu0 0.0
    %243 = vmatmul.mubr.f32.gmra.mrb[0].mxu0 %v174
    %v244 = vpop.f32.mrb[0].mxu0
    %v245 = vadd.f32 0.0, %v244
    %v246 = vpop.f32.mrb[0].mxu0
    %247 = vmatprep.mubr.f32.mxu0 0.0
    %248 = vmatmul.mubr.f32.gmra.mrb[0].mxu0 %v176
    %v249 = vpop.f32.mrb[0].mxu0
    %v250 = vadd.f32 0.0, %v249
    %v251 = vpop.f32.mrb[0].mxu0
    %252 = vdwg.mxu0
    %253 = vst.msk [vmem:[#allocation8] sm:$0xff] %vm76, %v245
    %254 = vst.msk [vmem:[#allocation8 + $0x8] sm:$0xff] %vm76, %v250
    %257 = vrot.lane.b32.xlu0 %v245, 96
    %v258 = vpop.permute.xlu0 %257
    %259 = vrot.lane.b32.xlu0 %v250, 96
    %v260 = vpop.permute.xlu0 %259
    %vm263 = vcmask 7168
    %264 = vst.msk [vmem:[%s6] sm:$0xff] %vm263, %v258
    %265 = vst.msk [vmem:[%s6 + $0x8] sm:$0xff] %vm263, %v260
    // Predicated region
    $region30: #{tpu_custom_call.1} parent=1 // pred_check
      _
    $region31: #{tpu_custom_call.1} parent=1 // pred_check_branch
      %267 = sbr.rel (0) target = $region33
    $region32: #{tpu_custom_call.1} parent=1 // pred_region
      %s269 = ssub.s32 256, 256
      %270 = vsyncadd [#allocation4], %s269
      %s271 = sshll.u32 [#allocation8], 4
      %s272 = int_to_ptr.vmem [resolvable:$true] %s271
      %277 = dma.vmem_to_hbm [thread:$0]  %s272, 256, %s4, [#allocation4], 128, 128, 8
    $region33: #{tpu_custom_call.1} parent=1 // pred_fallthru
      _
    // Predicated region
    $region34: #{tpu_custom_call.1} parent=1 // pred_check
      _
    $region35: #{tpu_custom_call.1} parent=1 // pred_check_branch
      %279 = sbr.rel (0) target = $region37
    $region36: #{tpu_custom_call.1} parent=1 // pred_region
      %s281 = ssub.s32 256, 256
      %282 = vsyncadd [#allocation10], %s281
      %s283 = sshll.u32 [#allocation9], 4
      %s284 = int_to_ptr.vmem [resolvable:$true] %s283
      %289 = dma.vmem_to_hbm [thread:$0]  %s284, 256, %s5, [#allocation10], 128, 128, 8
    $region37: #{tpu_custom_call.1} parent=1 // pred_fallthru
      _
    // Predicated region
    $region38: #{tpu_custom_call.1} parent=1 // pred_check
      _
    $region39: #{tpu_custom_call.1} parent=1 // pred_check_branch
      %291 = sbr.rel (0) target = $region41
    $region40: #{tpu_custom_call.1} parent=1 // pred_region
      _
    $region41: #{tpu_custom_call.1} parent=1 // pred_fallthru
      _
    // Predicated region
    $region42: #{tpu_custom_call.1} parent=1 // pred_check
      _
    $region43: #{tpu_custom_call.1} parent=1 // pred_check_branch
      %293 = sbr.rel (0) target = $region45
    $region44: #{tpu_custom_call.1} parent=1 // pred_region
      %294 = dma.done [#allocation4], 256
    $region45: #{tpu_custom_call.1} parent=1 // pred_fallthru
      _
    // Predicated region
    $region46: #{tpu_custom_call.1} parent=1 // pred_check
      _
    $region47: #{tpu_custom_call.1} parent=1 // pred_check_branch
      %296 = sbr.rel (0) target = $region49
    $region48: #{tpu_custom_call.1} parent=1 // pred_region
      %297 = dma.done [#allocation10], 256
    $region49: #{tpu_custom_call.1} parent=1 // pred_fallthru
      _
    // Predicated region
    $region50: #{tpu_custom_call.1} parent=1 // pred_check
      _
    $region51: #{tpu_custom_call.1} parent=1 // pred_check_branch
      %299 = sbr.rel (0) target = $region53
    $region52: #{tpu_custom_call.1} parent=1 // pred_region
      _
    $region53: #{tpu_custom_call.1} parent=1 // pred_fallthru
      _
    %300 = vsyncpa [#allocation3], 1
    %301 = vsyncpa [#allocation6], 1
    %302 = vsyncpa [#allocation4], 1
    %303 = vsyncpa [#allocation10], 1

</llo_original>
